<compile_context>
chip_gen: v6e
topology: v6e:2x2x1
jax: 0.10.0
libtpu: 0.0.40
codegen_flags: <defaults>
</compile_context>

<pallas_src>
import jax
import jax.numpy as jnp
from jax.experimental import pallas as pl
from jax.experimental.pallas import tpu as pltpu


DEFAULT_TILE_ROWS = 512   # good balance for v5e/v6e/v7x (see header comment)


def _round_up(x, m):
    return ((x + m - 1) // m) * m


def _pick_tile_rows(rows, tile_rows):
    # Clamp the tile to the (sublane-rounded) problem size; keep it a
    # multiple of 8 so the block shape satisfies the (8, 128) constraint.
    return max(8, min(tile_rows, _round_up(rows, 8)))


# ----------------------------------------------------------------------------
# Kernel 1: plain broadcast affine   y = x * a + b
#   a, b are (1, D) and broadcast over the row (sublane) axis.
# ----------------------------------------------------------------------------
def _affine_kernel(x_ref, a_ref, b_ref, o_ref):
    o_ref[...] = x_ref[...] * a_ref[...] + b_ref[...]


def affine_broadcast(x2d, a, b, *, tile_rows=DEFAULT_TILE_ROWS):
    R, D = x2d.shape
    tr = _pick_tile_rows(R, tile_rows)
    return pl.pallas_call(
        _affine_kernel,
        out_shape=jax.ShapeDtypeStruct((R, D), x2d.dtype),
        grid_spec=pltpu.PrefetchScalarGridSpec(
            num_scalar_prefetch=0,
            grid=(pl.cdiv(R, tr),),
            in_specs=[
                pl.BlockSpec((tr, D), lambda i: (i, 0)),
                pl.BlockSpec((1, D), lambda i: (0, 0)),   # constant index -> DMA'd once
                pl.BlockSpec((1, D), lambda i: (0, 0)),
            ],
            out_specs=pl.BlockSpec((tr, D), lambda i: (i, 0)),
        ),
        compiler_params=pltpu.CompilerParams(
            dimension_semantics=("parallel",)),           # megacore sharding on v7x
    )(x2d, a.reshape(1, D), b.reshape(1, D))


# ----------------------------------------------------------------------------
# Kernel 2: fused adapted affine (visual path inside the adapter layer range)
#   a = visual_a + text_a @ text_proj_down @ text_proj_up
#   y = x * a + visual_b
# The two tiny matmuls ((1,Dt)x(Dt,d) and (1,d)x(d,Dv)) run on the MXU, which
# is otherwise idle in this memory-bound kernel, so they are effectively free
# and we avoid a whole extra pallas_call launch plus an HBM round-trip of `a`.
# ----------------------------------------------------------------------------
def _adapted_affine_kernel(x_ref, va_ref, vb_ref, ta_ref, down_ref, up_ref, o_ref):
    low = jnp.dot(ta_ref[...], down_ref[...],
                  preferred_element_type=jnp.float32)      # (1, d)
    delta = jnp.dot(low, up_ref[...],
                    preferred_element_type=jnp.float32)    # (1, Dv)
    a = va_ref[...] + delta.astype(va_ref.dtype)           # (1, Dv)
    o_ref[...] = x_ref[...] * a + vb_ref[...]


def adapted_affine(x2d, visual_a, visual_b, text_a, text_proj_down,
                   text_proj_up, *, tile_rows=DEFAULT_TILE_ROWS):
    R, Dv = x2d.shape
    Dt = text_a.shape[-1]
    d = text_proj_down.shape[-1]
    tr = _pick_tile_rows(R, tile_rows)
    return pl.pallas_call(
        _adapted_affine_kernel,
        out_shape=jax.ShapeDtypeStruct((R, Dv), x2d.dtype),
        grid_spec=pltpu.PrefetchScalarGridSpec(
            num_scalar_prefetch=0,
            grid=(pl.cdiv(R, tr),),
            in_specs=[
                pl.BlockSpec((tr, Dv), lambda i: (i, 0)),
                pl.BlockSpec((1, Dv), lambda i: (0, 0)),
                pl.BlockSpec((1, Dv), lambda i: (0, 0)),
                pl.BlockSpec((1, Dt), lambda i: (0, 0)),
                pl.BlockSpec((Dt, d), lambda i: (0, 0)),
                pl.BlockSpec((d, Dv), lambda i: (0, 0)),
            ],
            out_specs=pl.BlockSpec((tr, Dv), lambda i: (i, 0)),
        ),
        compiler_params=pltpu.CompilerParams(
            dimension_semantics=("parallel",)),
    )(x2d, visual_a.reshape(1, Dv), visual_b.reshape(1, Dv),
      text_a.reshape(1, Dt), text_proj_down, text_proj_up)


# ----------------------------------------------------------------------------
# MAIL module (JAX / Pallas)
# ----------------------------------------------------------------------------
class Cfg:
    def __init__(self, d=16, t=1.0, start_layer=0, end_layer=11):
        self.d = d
        self.t = t
        self.start_layer = start_layer
        self.end_layer = end_layer


class MAILPallas:
    def __init__(self, cfg, visual_dim=768, text_dim=512, key=None):
        self.cfg = cfg
        if key is None:
            key = jax.random.PRNGKey(0)
        k1, k2 = jax.random.split(key)
        visual_scale = visual_dim ** (-0.5)
        text_scale = text_dim ** (-0.5)
        self.visual_a = jnp.ones((visual_dim,), jnp.float32)
        self.visual_b = jnp.zeros((visual_dim,), jnp.float32)
        self.text_a = jnp.ones((text_dim,), jnp.float32)
        self.text_b = jnp.zeros((text_dim,), jnp.float32)
        self.text_proj_down = (text_scale * cfg.t *
                               jax.random.normal(k1, (text_dim, cfg.d), jnp.float32))
        # PyTorch init multiplies by 0 -> zeros (kept as an explicit param).
        self.text_proj_up = (visual_scale * 0.0 *
                             jax.random.normal(k2, (cfg.d, visual_dim), jnp.float32))

    def __call__(self, x, is_text, i=0):
        return self.text_forward(x) if is_text else self.visual_forward(x, i)

    def visual_forward(self, x, i):
        D = x.shape[-1]
        x2d = x.reshape(-1, D)
        if self.cfg.start_layer <= i <= self.cfg.end_layer:
            y = adapted_affine(x2d, self.visual_a, self.visual_b,
                               self.text_a, self.text_proj_down, self.text_proj_up)
        else:
            y = affine_broadcast(x2d, self.visual_a, self.visual_b)
        return y.reshape(x.shape)

    def text_forward(self, x):
        D = x.shape[-1]
        y = affine_broadcast(x.reshape(-1, D), self.text_a, self.text_b)
        return y.reshape(x.shape)


if __name__ == "__main__":
    key = jax.random.PRNGKey(0)
    k_mod, k_xv, k_xt, k_up = jax.random.split(key, 4)

    visual_dim, text_dim = 768, 512
    cfg = Cfg(d=16, t=1.0, start_layer=0, end_layer=11)
    mail = MAILPallas(cfg, visual_dim=visual_dim, text_dim=text_dim, key=k_mod)

    # Give text_proj_up non-zero values (as after training) so the adapted
    # scale path is actually exercised numerically.
    mail.text_proj_up = 0.01 * jax.random.normal(k_up, (cfg.d, visual_dim), jnp.float32)

    # Small shapes: batch=2, seq=8, feature dim = module dims.
    x_visual = jax.random.normal(k_xv, (2, 8, visual_dim), jnp.float32)
    x_text = jax.random.normal(k_xt, (2, 8, text_dim), jnp.float32)

    # Visual path, layer inside [start_layer, end_layer] -> fused adapted scale.
    y_vis = jax.block_until_ready(mail(x_visual, is_text=False, i=3))
    # Visual path, layer outside the range -> plain visual_a scale.
    y_vis_out = jax.block_until_ready(mail(x_visual, is_text=False, i=20))
    # Text path.
    y_txt = jax.block_until_ready(mail(x_text, is_text=True))

    # Pure-JAX reference.
    a_ref = mail.visual_a + mail.text_a @ mail.text_proj_down @ mail.text_proj_up
    ref_vis = x_visual * a_ref + mail.visual_b
    ref_vis_out = x_visual * mail.visual_a + mail.visual_b
    ref_txt = x_text * mail.text_a + mail.text_b

    assert jnp.allclose(y_vis, ref_vis, atol=1e-4, rtol=1e-4)
    assert jnp.allclose(y_vis_out, ref_vis_out, atol=1e-5, rtol=1e-5)
    assert jnp.allclose(y_txt, ref_txt, atol=1e-5, rtol=1e-5)

    print("KERNEL_OK")
</pallas_src>

<mosaic_0001>
module attributes {stable_mosaic.version = 11 : i64} {
  func.func @_adapted_affine_kernel(%arg0: i32, %arg1: memref<16x768xf32, #tpu.memory_space<vmem>>, %arg2: memref<1x768xf32, #tpu.memory_space<vmem>>, %arg3: memref<1x768xf32, #tpu.memory_space<vmem>>, %arg4: memref<1x512xf32, #tpu.memory_space<vmem>>, %arg5: memref<512x16xf32, #tpu.memory_space<vmem>>, %arg6: memref<16x768xf32, #tpu.memory_space<vmem>>, %arg7: memref<16x768xf32, #tpu.memory_space<vmem>>) attributes {dimension_semantics = [#tpu.dimension_semantics<parallel>], iteration_bounds = array<i64: 1>, scalar_prefetch = 0 : i64, scratch_operands = 0 : i64, tpu.core_type = #tpu.core_type<tc>, window_params = [{transform_indices = @transform_0, window_bounds = array<i64: 16, 768>}, {pipeline_mode = #tpu.pipeline_mode<synchronous>, transform_indices = @transform_1, window_bounds = array<i64: 1, 768>}, {pipeline_mode = #tpu.pipeline_mode<synchronous>, transform_indices = @transform_2, window_bounds = array<i64: 1, 768>}, {pipeline_mode = #tpu.pipeline_mode<synchronous>, transform_indices = @transform_3, window_bounds = array<i64: 1, 512>}, {pipeline_mode = #tpu.pipeline_mode<synchronous>, transform_indices = @transform_4, window_bounds = array<i64: 512, 16>}, {pipeline_mode = #tpu.pipeline_mode<synchronous>, transform_indices = @transform_5, window_bounds = array<i64: 16, 768>}, {transform_indices = @transform_6, window_bounds = array<i64: 16, 768>}]} {
    %c0 = arith.constant 0 : index
    %c0_0 = arith.constant 0 : index
    %0 = vector.load %arg4[%c0, %c0_0] : memref<1x512xf32, #tpu.memory_space<vmem>>, vector<1x512xf32>
    %c0_1 = arith.constant 0 : index
    %c0_2 = arith.constant 0 : index
    %1 = vector.load %arg5[%c0_1, %c0_2] : memref<512x16xf32, #tpu.memory_space<vmem>>, vector<512x16xf32>
    %cst = arith.constant dense<0.000000e+00> : vector<1x16xf32>
    %2 = tpu.matmul %0, %1, %cst {dimension_numbers = #tpu.dot_dimension_numbers<[1], [0], [0], [1], [0, 0, 1, 1], [], []>} : vector<1x512xf32>, vector<512x16xf32>, vector<1x16xf32> -> vector<1x16xf32>
    %c0_3 = arith.constant 0 : index
    %c0_4 = arith.constant 0 : index
    %3 = vector.load %arg6[%c0_3, %c0_4] : memref<16x768xf32, #tpu.memory_space<vmem>>, vector<16x768xf32>
    %cst_5 = arith.constant dense<0.000000e+00> : vector<1x768xf32>
    %4 = tpu.matmul %2, %3, %cst_5 {dimension_numbers = #tpu.dot_dimension_numbers<[1], [0], [0], [1], [0, 0, 1, 1], [], []>} : vector<1x16xf32>, vector<16x768xf32>, vector<1x768xf32> -> vector<1x768xf32>
    %c0_6 = arith.constant 0 : index
    %c0_7 = arith.constant 0 : index
    %5 = vector.load %arg2[%c0_6, %c0_7] : memref<1x768xf32, #tpu.memory_space<vmem>>, vector<1x768xf32>
    %6 = arith.addf %5, %4 : vector<1x768xf32>
    %c0_8 = arith.constant 0 : index
    %c0_9 = arith.constant 0 : index
    %7 = vector.load %arg1[%c0_8, %c0_9] : memref<16x768xf32, #tpu.memory_space<vmem>>, vector<16x768xf32>
    %8 = vector.broadcast %6 : vector<1x768xf32> to vector<16x768xf32>
    %9 = arith.mulf %7, %8 : vector<16x768xf32>
    %c0_10 = arith.constant 0 : index
    %c0_11 = arith.constant 0 : index
    %10 = vector.load %arg3[%c0_10, %c0_11] : memref<1x768xf32, #tpu.memory_space<vmem>>, vector<1x768xf32>
    %11 = vector.broadcast %10 : vector<1x768xf32> to vector<16x768xf32>
    %12 = arith.addf %9, %11 : vector<16x768xf32>
    %c0_12 = arith.constant 0 : index
    %c0_13 = arith.constant 0 : index
    %13 = vector.load %arg7[%c0_12, %c0_13] : memref<16x768xf32, #tpu.memory_space<vmem>>, vector<16x768xf32>
    tpu.vector_store %arg7[%c0_12, %c0_13], %12 {strides = array<i32>} : memref<16x768xf32, #tpu.memory_space<vmem>>, vector<16x768xf32>,
    return
  }
  func.func @transform_0(%arg0: i32) -> (i32, i32) {
    %c0_i32 = arith.constant 0 : i32
    %c0_i32_0 = arith.constant 0 : i32
    return %arg0, %c0_i32 : i32, i32
  }
  func.func @transform_1(%arg0: i32) -> (i32, i32) {
    %c0_i32 = arith.constant 0 : i32
    %c0_i32_0 = arith.constant 0 : i32
    %c0_i32_1 = arith.constant 0 : i32
    return %c0_i32, %c0_i32_0 : i32, i32
  }
  func.func @transform_2(%arg0: i32) -> (i32, i32) {
    %c0_i32 = arith.constant 0 : i32
    %c0_i32_0 = arith.constant 0 : i32
    %c0_i32_1 = arith.constant 0 : i32
    return %c0_i32, %c0_i32_0 : i32, i32
  }
  func.func @transform_3(%arg0: i32) -> (i32, i32) {
    %c0_i32 = arith.constant 0 : i32
    %c0_i32_0 = arith.constant 0 : i32
    %c0_i32_1 = arith.constant 0 : i32
    return %c0_i32, %c0_i32_0 : i32, i32
  }
  func.func @transform_4(%arg0: i32) -> (i32, i32) {
    %c0_i32 = arith.constant 0 : i32
    %c0_i32_0 = arith.constant 0 : i32
    %c0_i32_1 = arith.constant 0 : i32
    return %c0_i32, %c0_i32_0 : i32, i32
  }
  func.func @transform_5(%arg0: i32) -> (i32, i32) {
    %c0_i32 = arith.constant 0 : i32
    %c0_i32_0 = arith.constant 0 : i32
    %c0_i32_1 = arith.constant 0 : i32
    return %c0_i32, %c0_i32_0 : i32, i32
  }
  func.func @transform_6(%arg0: i32) -> (i32, i32) {
    %c0_i32 = arith.constant 0 : i32
    %c0_i32_0 = arith.constant 0 : i32
    return %arg0, %c0_i32 : i32, i32
  }
}

</mosaic_0001>

<llo_original>
// kernel: tpu_custom_call.1
$region0: #{tpu_custom_call.1}
  #allocation0 [shape = 'u32[]', space=smem, size = 0x4, offset = 0x4, fixed_abs, tag = 'smem constant byte address 0x4 - core index']
  #allocation1 [shape = 'u32[144,128]{1,0:T(1,128)}', space=vmem, size = 0x12000, scoped, tag = 'internal scratch']
  %s0 = inlined_call_operand.vmem [shape: f32[16,768], index: 0, kind: input, shape index: {}]
  %s1 = inlined_call_operand.vmem [shape: f32[1,768], index: 1, kind: input, shape index: {}]
  %s2 = inlined_call_operand.vmem [shape: f32[1,768], index: 2, kind: input, shape index: {}]
  %s3 = inlined_call_operand.vmem [shape: f32[1,512], index: 3, kind: input, shape index: {}]
  %s4 = inlined_call_operand.vmem [shape: f32[512,16], index: 4, kind: input, shape index: {}]
  %s5 = inlined_call_operand.vmem [shape: f32[16,768], index: 5, kind: input, shape index: {}]
  %s6 = inlined_call_operand.hbm [shape: f32[16,768], index: 6, kind: output, shape index: {}]
  %s7 = sld [smem:[#allocation0]]
  $region34: #{tpu_custom_call.1} parent=0
    _
  %s9 = ssub.s32 1, %s7
  %s10 = scalar_select 0, %s9, %s7
  $region1: #{tpu_custom_call.1} parent=0
    #allocation2 [shape = 'u8[49152]{0}', space=vmem, size = 0xc000, scoped, tag = 'output window, operand 0, single buffered']
    #allocation3 [shape = 's32[1]{0}', space=sflag, size = 0x4, scoped, tag = 'scoped memory for tpu_custom_call.1']
    %11 = vsyncpa [#allocation3], 0
    // Predicated region
    $region2: #{tpu_custom_call.1} parent=1 // pred_check
      _
    $region3: #{tpu_custom_call.1} parent=1 // pred_check_branch
      %13 = sbr.rel (0) target = $region5
    $region4: #{tpu_custom_call.1} parent=1 // pred_region
      _
    $region5: #{tpu_custom_call.1} parent=1 // pred_fallthru
      _
    // Predicated region
    $region6: #{tpu_custom_call.1} parent=1 // pred_check
      _
    $region7: #{tpu_custom_call.1} parent=1 // pred_check_branch
      %15 = sbr.rel (0) target = $region9
    $region8: #{tpu_custom_call.1} parent=1 // pred_region
      _
    $region9: #{tpu_custom_call.1} parent=1 // pred_fallthru
      _
    // Predicated region
    $region10: #{tpu_custom_call.1} parent=1 // pred_check
      _
    $region11: #{tpu_custom_call.1} parent=1 // pred_check_branch
      %17 = sbr.rel (0) target = $region13
    $region12: #{tpu_custom_call.1} parent=1 // pred_region
      _
    $region13: #{tpu_custom_call.1} parent=1 // pred_fallthru
      _
    // Predicated region
    $region14: #{tpu_custom_call.1} parent=1 // pred_check
      _
    $region15: #{tpu_custom_call.1} parent=1 // pred_check_branch
      %19 = sbr.rel (0) target = $region17
    $region16: #{tpu_custom_call.1} parent=1 // pred_region
      _
    $region17: #{tpu_custom_call.1} parent=1 // pred_fallthru
      _
    // Predicated region
    $region18: #{tpu_custom_call.1} parent=1 // pred_check
      _
    $region19: #{tpu_custom_call.1} parent=1 // pred_check_branch
      %21 = sbr.rel (0) target = $region21
    $region20: #{tpu_custom_call.1} parent=1 // pred_region
      _
    $region21: #{tpu_custom_call.1} parent=1 // pred_fallthru
      _
    // Predicated region
    $region22: #{tpu_custom_call.1} parent=1 // pred_check
      _
    $region23: #{tpu_custom_call.1} parent=1 // pred_check_branch
      %23 = sbr.rel (0) target = $region25
    $region24: #{tpu_custom_call.1} parent=1 // pred_region
      _
    $region25: #{tpu_custom_call.1} parent=1 // pred_fallthru
      _
    %v24 = vld [vmem:[%s3] sm:$0xf]
    %v25 = vld [vmem:[%s4] sm:$0xff]
    %v26 = vld [vmem:[%s4 + $0x8] sm:$0xff]
    %v27 = vld [vmem:[%s4 + $0x10] sm:$0xff]
    %v28 = vld [vmem:[%s4 + $0x18] sm:$0xff]
    %v29 = vld [vmem:[%s4 + $0x20] sm:$0xff]
    %v30 = vld [vmem:[%s4 + $0x28] sm:$0xff]
    %v31 = vld [vmem:[%s4 + $0x30] sm:$0xff]
    %v32 = vld [vmem:[%s4 + $0x38] sm:$0xff]
    %v33 = vld [vmem:[%s4 + $0x40] sm:$0xff]
    %v34 = vld [vmem:[%s4 + $0x48] sm:$0xff]
    %v35 = vld [vmem:[%s4 + $0x50] sm:$0xff]
    %v36 = vld [vmem:[%s4 + $0x58] sm:$0xff]
    %v37 = vld [vmem:[%s4 + $0x60] sm:$0xff]
    %v38 = vld [vmem:[%s4 + $0x68] sm:$0xff]
    %v39 = vld [vmem:[%s4 + $0x70] sm:$0xff]
    %v40 = vld [vmem:[%s4 + $0x78] sm:$0xff]
    %v41 = vld [vmem:[%s4 + $0x80] sm:$0xff]
    %v42 = vld [vmem:[%s4 + $0x88] sm:$0xff]
    %v43 = vld [vmem:[%s4 + $0x90] sm:$0xff]
    %v44 = vld [vmem:[%s4 + $0x98] sm:$0xff]
    %v45 = vld [vmem:[%s4 + $0xa0] sm:$0xff]
    %v46 = vld [vmem:[%s4 + $0xa8] sm:$0xff]
    %v47 = vld [vmem:[%s4 + $0xb0] sm:$0xff]
    %v48 = vld [vmem:[%s4 + $0xb8] sm:$0xff]
    %v49 = vld [vmem:[%s4 + $0xc0] sm:$0xff]
    %v50 = vld [vmem:[%s4 + $0xc8] sm:$0xff]
    %v51 = vld [vmem:[%s4 + $0xd0] sm:$0xff]
    %v52 = vld [vmem:[%s4 + $0xd8] sm:$0xff]
    %v53 = vld [vmem:[%s4 + $0xe0] sm:$0xff]
    %v54 = vld [vmem:[%s4 + $0xe8] sm:$0xff]
    %v55 = vld [vmem:[%s4 + $0xf0] sm:$0xff]
    %v56 = vld [vmem:[%s4 + $0xf8] sm:$0xff]
    %v57 = vld [vmem:[%s4 + $0x100] sm:$0xff]
    %v58 = vld [vmem:[%s4 + $0x108] sm:$0xff]
    %v59 = vld [vmem:[%s4 + $0x110] sm:$0xff]
    %v60 = vld [vmem:[%s4 + $0x118] sm:$0xff]
    %v61 = vld [vmem:[%s4 + $0x120] sm:$0xff]
    %v62 = vld [vmem:[%s4 + $0x128] sm:$0xff]
    %v63 = vld [vmem:[%s4 + $0x130] sm:$0xff]
    %v64 = vld [vmem:[%s4 + $0x138] sm:$0xff]
    %v65 = vld [vmem:[%s4 + $0x140] sm:$0xff]
    %v66 = vld [vmem:[%s4 + $0x148] sm:$0xff]
    %v67 = vld [vmem:[%s4 + $0x150] sm:$0xff]
    %v68 = vld [vmem:[%s4 + $0x158] sm:$0xff]
    %v69 = vld [vmem:[%s4 + $0x160] sm:$0xff]
    %v70 = vld [vmem:[%s4 + $0x168] sm:$0xff]
    %v71 = vld [vmem:[%s4 + $0x170] sm:$0xff]
    %v72 = vld [vmem:[%s4 + $0x178] sm:$0xff]
    %v73 = vld [vmem:[%s4 + $0x180] sm:$0xff]
    %v74 = vld [vmem:[%s4 + $0x188] sm:$0xff]
    %v75 = vld [vmem:[%s4 + $0x190] sm:$0xff]
    %v76 = vld [vmem:[%s4 + $0x198] sm:$0xff]
    %v77 = vld [vmem:[%s4 + $0x1a0] sm:$0xff]
    %v78 = vld [vmem:[%s4 + $0x1a8] sm:$0xff]
    %v79 = vld [vmem:[%s4 + $0x1b0] sm:$0xff]
    %v80 = vld [vmem:[%s4 + $0x1b8] sm:$0xff]
    %v81 = vld [vmem:[%s4 + $0x1c0] sm:$0xff]
    %v82 = vld [vmem:[%s4 + $0x1c8] sm:$0xff]
    %v83 = vld [vmem:[%s4 + $0x1d0] sm:$0xff]
    %v84 = vld [vmem:[%s4 + $0x1d8] sm:$0xff]
    %v85 = vld [vmem:[%s4 + $0x1e0] sm:$0xff]
    %v86 = vld [vmem:[%s4 + $0x1e8] sm:$0xff]
    %v87 = vld [vmem:[%s4 + $0x1f0] sm:$0xff]
    %v88 = vld [vmem:[%s4 + $0x1f8] sm:$0xff]
    %v90 = vlaneseq
    %v91 = vshrl.u32 %v90, 7
    %v92 = vsub.s32 0, %v91
    %v93 = vrot.slane %v24, %v92
    %v94 = vlaneseq
    %v95 = vshrl.u32 %v94, 7
    %v96 = vsub.s32 1, %v95
    %v97 = vrot.slane %v24, %v96
    %v98 = vlaneseq
    %v99 = vshrl.u32 %v98, 7
    %v100 = vsub.s32 2, %v99
    %v101 = vrot.slane %v24, %v100
    %v102 = vlaneseq
    %v103 = vshrl.u32 %v102, 7
    %v104 = vsub.s32 3, %v103
    %v105 = vrot.slane %v24, %v104
    %110 = vmatprep.subr.mxu0 0.0
    %111 = vmatpush1.msra.mxu0 %v40
    %112 = vmatprep.subr.mxu0 0.0
    %113 = vmatpush1.msra.mxu0 %v39
    %114 = vmatprep.subr.mxu0 0.0
    %115 = vmatpush1.msra.mxu0 %v38
    %116 = vmatprep.subr.mxu0 0.0
    %117 = vmatpush1.msra.mxu0 %v37
    %118 = vmatprep.subr.mxu0 0.0
    %119 = vmatpush1.msra.mxu0 %v36
    %120 = vmatprep.subr.mxu0 0.0
    %121 = vmatpush1.msra.mxu0 %v35
    %122 = vmatprep.subr.mxu0 0.0
    %123 = vmatpush1.msra.mxu0 %v34
    %124 = vmatprep.subr.mxu0 0.0
    %125 = vmatpush1.msra.mxu0 %v33
    %126 = vmatprep.subr.mxu0 0.0
    %127 = vmatpush1.msra.mxu0 %v32
    %128 = vmatprep.subr.mxu0 0.0
    %129 = vmatpush1.msra.mxu0 %v31
    %130 = vmatprep.subr.mxu0 0.0
    %131 = vmatpush1.msra.mxu0 %v30
    %132 = vmatprep.subr.mxu0 0.0
    %133 = vmatpush1.msra.mxu0 %v29
    %134 = vmatprep.subr.mxu0 0.0
    %135 = vmatpush1.msra.mxu0 %v28
    %136 = vmatprep.subr.mxu0 0.0
    %137 = vmatpush1.msra.mxu0 %v27
    %138 = vmatprep.subr.mxu0 0.0
    %139 = vmatpush1.msra.mxu0 %v26
    %140 = vmatprep.subr.mxu0 0.0
    %141 = vmatpush1.msra.mxu0 %v25
    %142 = vmatprep.subr.mxu0 0.0
    %143 = vmatpush2.msra.mxu0 %v56
    %144 = vmatprep.subr.mxu0 0.0
    %145 = vmatpush2.msra.mxu0 %v55
    %146 = vmatprep.subr.mxu0 0.0
    %147 = vmatpush2.msra.mxu0 %v54
    %148 = vmatprep.subr.mxu0 0.0
    %149 = vmatpush2.msra.mxu0 %v53
    %150 = vmatprep.subr.mxu0 0.0
    %151 = vmatpush2.msra.mxu0 %v52
    %152 = vmatprep.subr.mxu0 0.0
    %153 = vmatpush2.msra.mxu0 %v51
    %154 = vmatprep.subr.mxu0 0.0
    %155 = vmatpush2.msra.mxu0 %v50
    %156 = vmatprep.subr.mxu0 0.0
    %157 = vmatpush2.msra.mxu0 %v49
    %158 = vmatprep.subr.mxu0 0.0
    %159 = vmatpush2.msra.mxu0 %v48
    %160 = vmatprep.subr.mxu0 0.0
    %161 = vmatpush2.msra.mxu0 %v47
    %162 = vmatprep.subr.mxu0 0.0
    %163 = vmatpush2.msra.mxu0 %v46
    %164 = vmatprep.subr.mxu0 0.0
    %165 = vmatpush2.msra.mxu0 %v45
    %166 = vmatprep.subr.mxu0 0.0
    %167 = vmatpush2.msra.mxu0 %v44
    %168 = vmatprep.subr.mxu0 0.0
    %169 = vmatpush2.msra.mxu0 %v43
    %170 = vmatprep.subr.mxu0 0.0
    %171 = vmatpush2.msra.mxu0 %v42
    %172 = vmatprep.subr.mxu0 0.0
    %173 = vmatpush2.msra.mxu0 %v41
    %174 = vmatprep.mubr.f32.mxu0 %v97
    %175 = vmatmul.mubr.f32.gmra.mxu0 %v93
    %v176 = vpop.f32.mrf.mxu0
    %v177 = vadd.f32 0.0, %v176
    %v178 = vpop.f32.mrf.mxu0
    %179 = vdwg.mxu0
    %180 = vmatprep.subr.mxu0 0.0
    %181 = vmatpush1.msra.mxu0 %v72
    %182 = vmatprep.subr.mxu0 0.0
    %183 = vmatpush1.msra.mxu0 %v71
    %184 = vmatprep.subr.mxu0 0.0
    %185 = vmatpush1.msra.mxu0 %v70
    %186 = vmatprep.subr.mxu0 0.0
    %187 = vmatpush1.msra.mxu0 %v69
    %188 = vmatprep.subr.mxu0 0.0
    %189 = vmatpush1.msra.mxu0 %v68
    %190 = vmatprep.subr.mxu0 0.0
    %191 = vmatpush1.msra.mxu0 %v67
    %192 = vmatprep.subr.mxu0 0.0
    %193 = vmatpush1.msra.mxu0 %v66
    %194 = vmatprep.subr.mxu0 0.0
    %195 = vmatpush1.msra.mxu0 %v65
    %196 = vmatprep.subr.mxu0 0.0
    %197 = vmatpush1.msra.mxu0 %v64
    %198 = vmatprep.subr.mxu0 0.0
    %199 = vmatpush1.msra.mxu0 %v63
    %200 = vmatprep.subr.mxu0 0.0
    %201 = vmatpush1.msra.mxu0 %v62
    %202 = vmatprep.subr.mxu0 0.0
    %203 = vmatpush1.msra.mxu0 %v61
    %204 = vmatprep.subr.mxu0 0.0
    %205 = vmatpush1.msra.mxu0 %v60
    %206 = vmatprep.subr.mxu0 0.0
    %207 = vmatpush1.msra.mxu0 %v59
    %208 = vmatprep.subr.mxu0 0.0
    %209 = vmatpush1.msra.mxu0 %v58
    %210 = vmatprep.subr.mxu0 0.0
    %211 = vmatpush1.msra.mxu0 %v57
    %212 = vmatprep.subr.mxu0 0.0
    %213 = vmatpush2.msra.mxu0 %v88
    %214 = vmatprep.subr.mxu0 0.0
    %215 = vmatpush2.msra.mxu0 %v87
    %216 = vmatprep.subr.mxu0 0.0
    %217 = vmatpush2.msra.mxu0 %v86
    %218 = vmatprep.subr.mxu0 0.0
    %219 = vmatpush2.msra.mxu0 %v85
    %220 = vmatprep.subr.mxu0 0.0
    %221 = vmatpush2.msra.mxu0 %v84
    %222 = vmatprep.subr.mxu0 0.0
    %223 = vmatpush2.msra.mxu0 %v83
    %224 = vmatprep.subr.mxu0 0.0
    %225 = vmatpush2.msra.mxu0 %v82
    %226 = vmatprep.subr.mxu0 0.0
    %227 = vmatpush2.msra.mxu0 %v81
    %228 = vmatprep.subr.mxu0 0.0
    %229 = vmatpush2.msra.mxu0 %v80
    %230 = vmatprep.subr.mxu0 0.0
    %231 = vmatpush2.msra.mxu0 %v79
    %232 = vmatprep.subr.mxu0 0.0
    %233 = vmatpush2.msra.mxu0 %v78
    %234 = vmatprep.subr.mxu0 0.0
    %235 = vmatpush2.msra.mxu0 %v77
    %236 = vmatprep.subr.mxu0 0.0
    %237 = vmatpush2.msra.mxu0 %v76
    %238 = vmatprep.subr.mxu0 0.0
    %239 = vmatpush2.msra.mxu0 %v75
    %240 = vmatprep.subr.mxu0 0.0
    %241 = vmatpush2.msra.mxu0 %v74
    %242 = vmatprep.subr.mxu0 0.0
    %243 = vmatpush2.msra.mxu0 %v73
    %244 = vmatprep.mubr.f32.mxu0 %v105
    %245 = vmatmul.mubr.f32.gmra.mxu0 %v101
    %v246 = vpop.f32.mrf.mxu0
    %v247 = vadd.f32 %v177, %v246
    %v248 = vpop.f32.mrf.mxu0
    %249 = vdwg.mxu0
    %v250 = vld [vmem:[%s5] sm:$0xff]
    %v251 = vld [vmem:[%s5 + $0x8] sm:$0xff]
    %v252 = vld [vmem:[%s5 + $0x10] sm:$0xff]
    %v253 = vld [vmem:[%s5 + $0x18] sm:$0xff]
    %v254 = vld [vmem:[%s5 + $0x20] sm:$0xff]
    %v255 = vld [vmem:[%s5 + $0x28] sm:$0xff]
    %v256 = vld [vmem:[%s5 + $0x30] sm:$0xff]
    %v257 = vld [vmem:[%s5 + $0x38] sm:$0xff]
    %v258 = vld [vmem:[%s5 + $0x40] sm:$0xff]
    %v259 = vld [vmem:[%s5 + $0x48] sm:$0xff]
    %v260 = vld [vmem:[%s5 + $0x50] sm:$0xff]
    %v261 = vld [vmem:[%s5 + $0x58] sm:$0xff]
    %vm262 = vcmask 130048
    %v264 = vsel %vm262, %v247, 0
    %266 = vmatprep.subr.mxu0 0.0
    %267 = vmatpush1.msra.mxu0 0.0
    %268 = vmatprep.subr.mxu0 0.0
    %269 = vmatpush1.msra.mxu0 0.0
    %270 = vmatprep.subr.mxu0 0.0
    %271 = vmatpush1.msra.mxu0 0.0
    %272 = vmatprep.subr.mxu0 0.0
    %273 = vmatpush1.msra.mxu0 0.0
    %274 = vmatprep.subr.mxu0 0.0
    %275 = vmatpush1.msra.mxu0 0.0
    %276 = vmatprep.subr.mxu0 0.0
    %277 = vmatpush1.msra.mxu0 0.0
    %278 = vmatprep.subr.mxu0 0.0
    %279 = vmatpush1.msra.mxu0 0.0
    %280 = vmatprep.subr.mxu0 0.0
    %281 = vmatpush1.msra.mxu0 0.0
    %282 = vmatprep.subr.mxu0 0.0
    %283 = vmatpush1.msra.mxu0 0.0
    %284 = vmatprep.subr.mxu0 0.0
    %285 = vmatpush1.msra.mxu0 0.0
    %286 = vmatprep.subr.mxu0 0.0
    %287 = vmatpush1.msra.mxu0 0.0
    %288 = vmatprep.subr.mxu0 0.0
    %289 = vmatpush1.msra.mxu0 0.0
    %290 = vmatprep.subr.mxu0 0.0
    %291 = vmatpush1.msra.mxu0 0.0
    %292 = vmatprep.subr.mxu0 0.0
    %293 = vmatpush1.msra.mxu0 0.0
    %294 = vmatprep.subr.mxu0 %v257
    %295 = vmatpush1.msra.mxu0 %v256
    %296 = vmatprep.subr.mxu0 %v251
    %297 = vmatpush1.msra.mxu0 %v250
    %298 = vmatprep.subr.mxu0 0.0
    %299 = vmatpush2.msra.mxu0 0.0
    %300 = vmatprep.subr.mxu0 0.0
    %301 = vmatpush2.msra.mxu0 0.0
    %302 = vmatprep.subr.mxu0 0.0
    %303 = vmatpush2.msra.mxu0 0.0
    %304 = vmatprep.subr.mxu0 0.0
    %305 = vmatpush2.msra.mxu0 0.0
    %306 = vmatprep.subr.mxu0 0.0
    %307 = vmatpush2.msra.mxu0 0.0
    %308 = vmatprep.subr.mxu0 0.0
    %309 = vmatpush2.msra.mxu0 0.0
    %310 = vmatprep.subr.mxu0 0.0
    %311 = vmatpush2.msra.mxu0 0.0
    %312 = vmatprep.subr.mxu0 0.0
    %313 = vmatpush2.msra.mxu0 0.0
    %314 = vmatprep.subr.mxu0 0.0
    %315 = vmatpush2.msra.mxu0 0.0
    %316 = vmatprep.subr.mxu0 0.0
    %317 = vmatpush2.msra.mxu0 0.0
    %318 = vmatprep.subr.mxu0 0.0
    %319 = vmatpush2.msra.mxu0 0.0
    %320 = vmatprep.subr.mxu0 0.0
    %321 = vmatpush2.msra.mxu0 0.0
    %322 = vmatprep.subr.mxu0 0.0
    %323 = vmatpush2.msra.mxu0 0.0
    %324 = vmatprep.subr.mxu0 0.0
    %325 = vmatpush2.msra.mxu0 0.0
    %326 = vmatprep.subr.mxu0 0.0
    %327 = vmatpush2.msra.mxu0 0.0
    %328 = vmatprep.subr.mxu0 0.0
    %329 = vmatpush2.msra.mxu0 0.0
    %330 = vmatprep.mubr.f32.mxu0 0.0
    %331 = vmatmul.mubr.f32.gmra.mxu0 %v264
    %v332 = vpop.f32.mrf.mxu0
    %v333 = vadd.f32 0.0, %v332
    %v334 = vpop.f32.mrf.mxu0
    %v335 = vadd.f32 0.0, %v334
    %336 = vdwg.mxu0
    %337 = vmatprep.subr.mxu0 0.0
    %338 = vmatpush1.msra.mxu0 0.0
    %339 = vmatprep.subr.mxu0 0.0
    %340 = vmatpush1.msra.mxu0 0.0
    %341 = vmatprep.subr.mxu0 0.0
    %342 = vmatpush1.msra.mxu0 0.0
    %343 = vmatprep.subr.mxu0 0.0
    %344 = vmatpush1.msra.mxu0 0.0
    %345 = vmatprep.subr.mxu0 0.0
    %346 = vmatpush1.msra.mxu0 0.0
    %347 = vmatprep.subr.mxu0 0.0
    %348 = vmatpush1.msra.mxu0 0.0
    %349 = vmatprep.subr.mxu0 0.0
    %350 = vmatpush1.msra.mxu0 0.0
    %351 = vmatprep.subr.mxu0 0.0
    %352 = vmatpush1.msra.mxu0 0.0
    %353 = vmatprep.subr.mxu0 0.0
    %354 = vmatpush1.msra.mxu0 0.0
    %355 = vmatprep.subr.mxu0 0.0
    %356 = vmatpush1.msra.mxu0 0.0
    %357 = vmatprep.subr.mxu0 0.0
    %358 = vmatpush1.msra.mxu0 0.0
    %359 = vmatprep.subr.mxu0 0.0
    %360 = vmatpush1.msra.mxu0 0.0
    %361 = vmatprep.subr.mxu0 0.0
    %362 = vmatpush1.msra.mxu0 0.0
    %363 = vmatprep.subr.mxu0 0.0
    %364 = vmatpush1.msra.mxu0 0.0
    %365 = vmatprep.subr.mxu0 %v259
    %366 = vmatpush1.msra.mxu0 %v258
    %367 = vmatprep.subr.mxu0 %v253
    %368 = vmatpush1.msra.mxu0 %v252
    %369 = vmatprep.subr.mxu0 0.0
    %370 = vmatpush2.msra.mxu0 0.0
    %371 = vmatprep.subr.mxu0 0.0
    %372 = vmatpush2.msra.mxu0 0.0
    %373 = vmatprep.subr.mxu0 0.0
    %374 = vmatpush2.msra.mxu0 0.0
    %375 = vmatprep.subr.mxu0 0.0
    %376 = vmatpush2.msra.mxu0 0.0
    %377 = vmatprep.subr.mxu0 0.0
    %378 = vmatpush2.msra.mxu0 0.0
    %379 = vmatprep.subr.mxu0 0.0
    %380 = vmatpush2.msra.mxu0 0.0
    %381 = vmatprep.subr.mxu0 0.0
    %382 = vmatpush2.msra.mxu0 0.0
    %383 = vmatprep.subr.mxu0 0.0
    %384 = vmatpush2.msra.mxu0 0.0
    %385 = vmatprep.subr.mxu0 0.0
    %386 = vmatpush2.msra.mxu0 0.0
    %387 = vmatprep.subr.mxu0 0.0
    %388 = vmatpush2.msra.mxu0 0.0
    %389 = vmatprep.subr.mxu0 0.0
    %390 = vmatpush2.msra.mxu0 0.0
    %391 = vmatprep.subr.mxu0 0.0
    %392 = vmatpush2.msra.mxu0 0.0
    %393 = vmatprep.subr.mxu0 0.0
    %394 = vmatpush2.msra.mxu0 0.0
    %395 = vmatprep.subr.mxu0 0.0
    %396 = vmatpush2.msra.mxu0 0.0
    %397 = vmatprep.subr.mxu0 0.0
    %398 = vmatpush2.msra.mxu0 0.0
    %399 = vmatprep.subr.mxu0 0.0
    %400 = vmatpush2.msra.mxu0 0.0
    %401 = vmatprep.mubr.f32.mxu0 0.0
    %402 = vmatmul.mubr.f32.gmra.mxu0 %v264
    %v403 = vpop.f32.mrf.mxu0
    %v404 = vadd.f32 0.0, %v403
    %v405 = vpop.f32.mrf.mxu0
    %v406 = vadd.f32 0.0, %v405
    %407 = vdwg.mxu0
    %408 = vmatprep.subr.mxu0 0.0
    %409 = vmatpush1.msra.mxu0 0.0
    %410 = vmatprep.subr.mxu0 0.0
    %411 = vmatpush1.msra.mxu0 0.0
    %412 = vmatprep.subr.mxu0 0.0
    %413 = vmatpush1.msra.mxu0 0.0
    %414 = vmatprep.subr.mxu0 0.0
    %415 = vmatpush1.msra.mxu0 0.0
    %416 = vmatprep.subr.mxu0 0.0
    %417 = vmatpush1.msra.mxu0 0.0
    %418 = vmatprep.subr.mxu0 0.0
    %419 = vmatpush1.msra.mxu0 0.0
    %420 = vmatprep.subr.mxu0 0.0
    %421 = vmatpush1.msra.mxu0 0.0
    %422 = vmatprep.subr.mxu0 0.0
    %423 = vmatpush1.msra.mxu0 0.0
    %424 = vmatprep.subr.mxu0 0.0
    %425 = vmatpush1.msra.mxu0 0.0
    %426 = vmatprep.subr.mxu0 0.0
    %427 = vmatpush1.msra.mxu0 0.0
    %428 = vmatprep.subr.mxu0 0.0
    %429 = vmatpush1.msra.mxu0 0.0
    %430 = vmatprep.subr.mxu0 0.0
    %431 = vmatpush1.msra.mxu0 0.0
    %432 = vmatprep.subr.mxu0 0.0
    %433 = vmatpush1.msra.mxu0 0.0
    %434 = vmatprep.subr.mxu0 0.0
    %435 = vmatpush1.msra.mxu0 0.0
    %436 = vmatprep.subr.mxu0 %v261
    %437 = vmatpush1.msra.mxu0 %v260
    %438 = vmatprep.subr.mxu0 %v255
    %439 = vmatpush1.msra.mxu0 %v254
    %440 = vmatprep.subr.mxu0 0.0
    %441 = vmatpush2.msra.mxu0 0.0
    %442 = vmatprep.subr.mxu0 0.0
    %443 = vmatpush2.msra.mxu0 0.0
    %444 = vmatprep.subr.mxu0 0.0
    %445 = vmatpush2.msra.mxu0 0.0
    %446 = vmatprep.subr.mxu0 0.0
    %447 = vmatpush2.msra.mxu0 0.0
    %448 = vmatprep.subr.mxu0 0.0
    %449 = vmatpush2.msra.mxu0 0.0
    %450 = vmatprep.subr.mxu0 0.0
    %451 = vmatpush2.msra.mxu0 0.0
    %452 = vmatprep.subr.mxu0 0.0
    %453 = vmatpush2.msra.mxu0 0.0
    %454 = vmatprep.subr.mxu0 0.0
    %455 = vmatpush2.msra.mxu0 0.0
    %456 = vmatprep.subr.mxu0 0.0
    %457 = vmatpush2.msra.mxu0 0.0
    %458 = vmatprep.subr.mxu0 0.0
    %459 = vmatpush2.msra.mxu0 0.0
    %460 = vmatprep.subr.mxu0 0.0
    %461 = vmatpush2.msra.mxu0 0.0
    %462 = vmatprep.subr.mxu0 0.0
    %463 = vmatpush2.msra.mxu0 0.0
    %464 = vmatprep.subr.mxu0 0.0
    %465 = vmatpush2.msra.mxu0 0.0
    %466 = vmatprep.subr.mxu0 0.0
    %467 = vmatpush2.msra.mxu0 0.0
    %468 = vmatprep.subr.mxu0 0.0
    %469 = vmatpush2.msra.mxu0 0.0
    %470 = vmatprep.subr.mxu0 0.0
    %471 = vmatpush2.msra.mxu0 0.0
    %472 = vmatprep.mubr.f32.mxu0 0.0
    %473 = vmatmul.mubr.f32.gmra.mxu0 %v264
    %v474 = vpop.f32.mrf.mxu0
    %v475 = vadd.f32 0.0, %v474
    %v476 = vpop.f32.mrf.mxu0
    %v477 = vadd.f32 0.0, %v476
    %478 = vdwg.mxu0
    %v479 = vld [vmem:[%s1] sm:$0x3f]
    %v486 = vcombine.low %v333, %v335
    %v487 = vcombine.low %v404, %v406
    %v488 = vcombine.low %v475, %v477
    %v490 = vunpack.c.l.s4 1966171168
    %v491 = vunpack.c.0.s8 %v490
    %v492 = vlaneseq
    %v493 = vshrl.u32 %v492, 7
    %v494 = vsub.s32 %v491, %v493
    %v495 = vrot.slane %v486, %v494
    %v497 = vunpack.c.l.s4 1966171168
    %v498 = vunpack.c.0.s8 %v497
    %v499 = vlaneseq
    %v500 = vshrl.u32 %v499, 7
    %v501 = vsub.s32 %v498, %v500
    %v502 = vrot.slane %v487, %v501
    %v504 = vunpack.c.l.s4 1966171168
    %v505 = vunpack.c.0.s8 %v504
    %v506 = vlaneseq
    %v507 = vshrl.u32 %v506, 7
    %v508 = vsub.s32 %v505, %v507
    %v509 = vrot.slane %v488, %v508
    %v510 = vcombine.low %v495, %v502
    %v512 = vunpack.c.l.s4 1966171168
    %v513 = vunpack.c.0.s8 %v512
    %v514 = vlaneseq
    %v515 = vshrl.u32 %v514, 7
    %v516 = vsub.s32 %v513, %v515
    %v517 = vrot.slane %v510, %v516
    %v519 = vunpack.c.l.s4 1966171168
    %v520 = vunpack.c.0.s8 %v519
    %v521 = vlaneseq
    %v522 = vshrl.u32 %v521, 7
    %v523 = vsub.s32 %v520, %v522
    %v524 = vrot.slane %v509, %v523
    %v525 = vcombine.low %v517, %v524
    %v527 = vadd.f32 %v479, %v525
    %v528 = vld [vmem:[%s0] sm:$0xff]
    %v529 = vld [vmem:[%s0 + $0x8] sm:$0xff]
    %v530 = vld [vmem:[%s0 + $0x10] sm:$0xff]
    %v531 = vld [vmem:[%s0 + $0x18] sm:$0xff]
    %v532 = vld [vmem:[%s0 + $0x20] sm:$0xff]
    %v533 = vld [vmem:[%s0 + $0x28] sm:$0xff]
    %v534 = vld [vmem:[%s0 + $0x30] sm:$0xff]
    %v535 = vld [vmem:[%s0 + $0x38] sm:$0xff]
    %v536 = vld [vmem:[%s0 + $0x40] sm:$0xff]
    %v537 = vld [vmem:[%s0 + $0x48] sm:$0xff]
    %v538 = vld [vmem:[%s0 + $0x50] sm:$0xff]
    %v539 = vld [vmem:[%s0 + $0x58] sm:$0xff]
    %v541 = vlaneseq
    %v542 = vshrl.u32 %v541, 7
    %v543 = vsub.s32 0, %v542
    %v544 = vrot.slane %v527, %v543
    %v545 = vlaneseq
    %v546 = vshrl.u32 %v545, 7
    %v547 = vsub.s32 1, %v546
    %v548 = vrot.slane %v527, %v547
    %v549 = vlaneseq
    %v550 = vshrl.u32 %v549, 7
    %v551 = vsub.s32 2, %v550
    %v552 = vrot.slane %v527, %v551
    %v553 = vlaneseq
    %v554 = vshrl.u32 %v553, 7
    %v555 = vsub.s32 3, %v554
    %v556 = vrot.slane %v527, %v555
    %v557 = vlaneseq
    %v558 = vshrl.u32 %v557, 7
    %v559 = vsub.s32 4, %v558
    %v560 = vrot.slane %v527, %v559
    %v561 = vlaneseq
    %v562 = vshrl.u32 %v561, 7
    %v563 = vsub.s32 5, %v562
    %v564 = vrot.slane %v527, %v563
    %v571 = vmul.f32 %v528, %v544
    %v572 = vmul.f32 %v529, %v548
    %v573 = vmul.f32 %v530, %v552
    %v574 = vmul.f32 %v531, %v556
    %v575 = vmul.f32 %v532, %v560
    %v576 = vmul.f32 %v533, %v564
    %v577 = vmul.f32 %v534, %v544
    %v578 = vmul.f32 %v535, %v548
    %v579 = vmul.f32 %v536, %v552
    %v580 = vmul.f32 %v537, %v556
    %v581 = vmul.f32 %v538, %v560
    %v582 = vmul.f32 %v539, %v564
    %v583 = vld [vmem:[%s2] sm:$0x3f]
    %v585 = vlaneseq
    %v586 = vshrl.u32 %v585, 7
    %v587 = vsub.s32 0, %v586
    %v588 = vrot.slane %v583, %v587
    %v589 = vlaneseq
    %v590 = vshrl.u32 %v589, 7
    %v591 = vsub.s32 1, %v590
    %v592 = vrot.slane %v583, %v591
    %v593 = vlaneseq
    %v594 = vshrl.u32 %v593, 7
    %v595 = vsub.s32 2, %v594
    %v596 = vrot.slane %v583, %v595
    %v597 = vlaneseq
    %v598 = vshrl.u32 %v597, 7
    %v599 = vsub.s32 3, %v598
    %v600 = vrot.slane %v583, %v599
    %v601 = vlaneseq
    %v602 = vshrl.u32 %v601, 7
    %v603 = vsub.s32 4, %v602
    %v604 = vrot.slane %v583, %v603
    %v605 = vlaneseq
    %v606 = vshrl.u32 %v605, 7
    %v607 = vsub.s32 5, %v606
    %v608 = vrot.slane %v583, %v607
    %v615 = vadd.f32 %v571, %v588
    %v616 = vadd.f32 %v572, %v592
    %v617 = vadd.f32 %v573, %v596
    %v618 = vadd.f32 %v574, %v600
    %v619 = vadd.f32 %v575, %v604
    %v620 = vadd.f32 %v576, %v608
    %v621 = vadd.f32 %v577, %v588
    %v622 = vadd.f32 %v578, %v592
    %v623 = vadd.f32 %v579, %v596
    %v624 = vadd.f32 %v580, %v600
    %v625 = vadd.f32 %v581, %v604
    %v626 = vadd.f32 %v582, %v608
    %627 = vst [vmem:[#allocation2] sm:$0xff] %v615
    %628 = vst [vmem:[#allocation2 + $0x8] sm:$0xff] %v616
    %629 = vst [vmem:[#allocation2 + $0x10] sm:$0xff] %v617
    %630 = vst [vmem:[#allocation2 + $0x18] sm:$0xff] %v618
    %631 = vst [vmem:[#allocation2 + $0x20] sm:$0xff] %v619
    %632 = vst [vmem:[#allocation2 + $0x28] sm:$0xff] %v620
    %633 = vst [vmem:[#allocation2 + $0x30] sm:$0xff] %v621
    %634 = vst [vmem:[#allocation2 + $0x38] sm:$0xff] %v622
    %635 = vst [vmem:[#allocation2 + $0x40] sm:$0xff] %v623
    %636 = vst [vmem:[#allocation2 + $0x48] sm:$0xff] %v624
    %637 = vst [vmem:[#allocation2 + $0x50] sm:$0xff] %v625
    %638 = vst [vmem:[#allocation2 + $0x58] sm:$0xff] %v626
    // Predicated region
    $region26: #{tpu_custom_call.1} parent=1 // pred_check
      _
    $region27: #{tpu_custom_call.1} parent=1 // pred_check_branch
      %640 = sbr.rel (0) target = $region29
    $region28: #{tpu_custom_call.1} parent=1 // pred_region
      %s642 = ssub.s32 1536, 1536
      %643 = vsyncadd [#allocation3], %s642
      %s644 = sshll.u32 [#allocation2], 4
      %s645 = int_to_ptr.vmem [resolvable:$true] %s644
      %650 = dma.vmem_to_hbm [thread:$0]  %s645, 1536, %s6, [#allocation3], 768, 768, 48
    $region29: #{tpu_custom_call.1} parent=1 // pred_fallthru
      _
    // Predicated region
    $region30: #{tpu_custom_call.1} parent=1 // pred_check
      _
    $region31: #{tpu_custom_call.1} parent=1 // pred_check_branch
      %652 = sbr.rel (0) target = $region33
    $region32: #{tpu_custom_call.1} parent=1 // pred_region
      %653 = dma.done [#allocation3], 1536
    $region33: #{tpu_custom_call.1} parent=1 // pred_fallthru
      _
    %654 = vsyncpa [#allocation3], 1

</llo_original>
